<compile_context>
chip_gen: v5e
topology: v5e:2x2
jax: 0.10.0
libtpu: 0.0.40
codegen_flags: <defaults>
</compile_context>

<pallas_src>
import functools

import jax
import jax.numpy as jnp
from jax import lax
from jax.experimental import pallas as pl
from jax.experimental.pallas import tpu as pltpu

LANES = 128   # lane width; fused weights and the output slab are padded to this
SUBLANE = 8   # f32 sublane height


def ppo_fused_kernel(x_ref, w1_ref, b1_ref, w2_ref, b2_ref, w3_ref, b3_ref,
                     out_ref, *, action_dim):
    # bf16 operands on the MXU (single-pass matmuls); f32 accumulation + f32 biases.
    x = x_ref[...].astype(jnp.bfloat16)                         # [TB, D]

    # Fused layer 1: policy hidden in lanes [0, H), value hidden in lanes [H, 2H).
    h = jnp.dot(x, w1_ref[...], preferred_element_type=jnp.float32) + b1_ref[...]
    h = jnp.maximum(h, 0.0)
    # TODO(synk): nn.Dropout(0.2) is stochastic in train mode; implemented with
    # eval/inference semantics (identity).

    # Fused layer 2 (block-diagonal weights keep the two branches independent).
    h = jnp.dot(h.astype(jnp.bfloat16), w2_ref[...],
                preferred_element_type=jnp.float32) + b2_ref[...]
    h = jnp.maximum(h, 0.0)

    # Fused layer 3: lanes 0..A-1 = policy logits, lane A = value, rest = 0.
    y = jnp.dot(h.astype(jnp.bfloat16), w3_ref[...],
                preferred_element_type=jnp.float32) + b3_ref[...]

    # Masked softmax over the logit lanes only.  Exact reciprocal (division): probs
    # sum to 1 within f32 eps, and the EUP op is invisible next to the 128-lane exp.
    col = lax.broadcasted_iota(jnp.int32, y.shape, 1)
    is_logit = col < action_dim
    masked = jnp.where(is_logit, y, -jnp.inf)
    m = jnp.max(masked, axis=-1, keepdims=True)
    e = jnp.exp(masked - m)                      # exactly 0 on non-logit lanes
    denom = jnp.sum(e, axis=-1, keepdims=True)
    probs = e / denom

    # One unmasked lane-dense store: probs | value | zeros.
    out_ref[...] = jnp.where(is_logit, probs,
                             jnp.where(col == action_dim, y, 0.0))


def _round_up(x, m):
    return ((x + m - 1) // m) * m


def ppo_forward(state, fused_params, *, action_dim, tile_b=2048, return_slab=False):
    """Fused PPONetwork forward. Returns (action_probs, value), or the raw lane-dense
    [B, 128] slab if return_slab=True (probs in lanes [0, A), value in lane A)."""
    B, D = state.shape
    w1, b1, w2, b2, w3, b3 = fused_params

    # Batch tiling:
    #  * once B >= 16, force >= 2 grid steps so dimension_semantics=("parallel",)
    #    gives each of v7x's two TensorCores a block (no-op on 1-TC v5e/v6e);
    #  * tiles rounded up to the 8-row sublane only, so padded tail is a few rows;
    #  * tile_b=2048 amortizes per-grid-step overhead; working set stays ~2.5 MiB.
    min_blocks = 2 if B >= 2 * SUBLANE else 1
    n_blocks = max(min_blocks, pl.cdiv(B, tile_b))
    tb = _round_up(pl.cdiv(B, n_blocks), SUBLANE)
    n_blocks = pl.cdiv(B, tb)
    b_pad = n_blocks * tb
    if b_pad != B:
        state = jnp.pad(state, ((0, b_pad - B), (0, 0)))

    kernel = functools.partial(ppo_fused_kernel, action_dim=action_dim)

    def resident(arr):
        # Full-array block, same block index every grid step -> stays VMEM-resident.
        return pl.BlockSpec(arr.shape, lambda i: (0, 0))

    out = pl.pallas_call(
        kernel,
        out_shape=jax.ShapeDtypeStruct((b_pad, LANES), jnp.float32),
        grid=(n_blocks,),
        in_specs=[
            pl.BlockSpec((tb, D), lambda i: (i, 0)),        # state: batch-tiled
            resident(w1), resident(b1),
            resident(w2), resident(b2),
            resident(w3), resident(b3),
        ],
        out_specs=pl.BlockSpec((tb, LANES), lambda i: (i, 0)),
        compiler_params=pltpu.CompilerParams(
            dimension_semantics=("parallel",)),             # shards batch across v7x TCs
    )(state, w1, b1, w2, b2, w3, b3)

    slab = out[:B]
    if return_slab:
        return slab
    probs = slab[:, :action_dim]
    value = slab[:, action_dim:action_dim + 1]
    return probs, value


def init_params(key, input_dim, hidden_dim, action_dim):
    """Deterministic synthetic parameters (shapes match the nn.Linear layers),
    stored as [in_features, out_features], f32."""
    ks = jax.random.split(key, 12)

    def lin(kw, kb, fan_in, fan_out):
        w = jax.random.normal(kw, (fan_in, fan_out), jnp.float32) * 0.1
        b = jax.random.normal(kb, (1, fan_out), jnp.float32) * 0.01
        return w, b

    pw1, pb1 = lin(ks[0], ks[1], input_dim, hidden_dim)
    pw2, pb2 = lin(ks[2], ks[3], hidden_dim, hidden_dim)
    pw3, pb3 = lin(ks[4], ks[5], hidden_dim, action_dim)
    vw1, vb1 = lin(ks[6], ks[7], input_dim, hidden_dim)
    vw2, vb2 = lin(ks[8], ks[9], hidden_dim, hidden_dim)
    vw3, vb3 = lin(ks[10], ks[11], hidden_dim, 1)

    return dict(
        pw1=pw1, pb1=pb1, pw2=pw2, pb2=pb2, pw3=pw3, pb3=pb3,
        vw1=vw1, vb1=vb1, vw2=vw2, vb2=vb2, vw3=vw3, vb3=vb3,
    )


def pack_params(p, input_dim, hidden_dim, action_dim):
    """Fuse policy/value branches into 3 lane-padded weight/bias pairs.
    Weights are stored bf16 (MXU operands); biases stay f32 (post-accumulation add)."""
    H = hidden_dim
    assert 2 * H <= LANES and action_dim + 1 <= LANES, "fused packing needs 2H, A+1 <= 128"

    w1 = jnp.zeros((input_dim, LANES), jnp.float32)
    w1 = w1.at[:, :H].set(p["pw1"]).at[:, H:2 * H].set(p["vw1"])
    b1 = jnp.zeros((1, LANES), jnp.float32)
    b1 = b1.at[:, :H].set(p["pb1"]).at[:, H:2 * H].set(p["vb1"])

    w2 = jnp.zeros((LANES, LANES), jnp.float32)
    w2 = w2.at[:H, :H].set(p["pw2"]).at[H:2 * H, H:2 * H].set(p["vw2"])
    b2 = jnp.zeros((1, LANES), jnp.float32)
    b2 = b2.at[:, :H].set(p["pb2"]).at[:, H:2 * H].set(p["vb2"])

    w3 = jnp.zeros((LANES, LANES), jnp.float32)
    w3 = w3.at[:H, :action_dim].set(p["pw3"])
    w3 = w3.at[H:2 * H, action_dim:action_dim + 1].set(p["vw3"])
    b3 = jnp.zeros((1, LANES), jnp.float32)
    b3 = b3.at[:, :action_dim].set(p["pb3"])
    b3 = b3.at[:, action_dim:action_dim + 1].set(p["vb3"])

    return (w1.astype(jnp.bfloat16), b1,
            w2.astype(jnp.bfloat16), b2,
            w3.astype(jnp.bfloat16), b3)


if __name__ == "__main__":
    B = 8           # batch of states (launch-overhead bound at this size; see notes)
    INPUT_DIM = 16  # state dimension
    HIDDEN_DIM = 32
    ACTION_DIM = 4

    key = jax.random.PRNGKey(0)
    k_state, k_params = jax.random.split(key)

    state = jax.random.normal(k_state, (B, INPUT_DIM), jnp.float32)
    params = init_params(k_params, INPUT_DIM, HIDDEN_DIM, ACTION_DIM)
    fused = pack_params(params, INPUT_DIM, HIDDEN_DIM, ACTION_DIM)

    action_probs, value = ppo_forward(state, fused, action_dim=ACTION_DIM)
    jax.block_until_ready((action_probs, value))

    # Pure-JAX f32 reference against the *unfused* parameters (same math; the kernel
    # uses bf16 matmul operands with f32 accumulation, hence the ~1e-2 tolerances).
    def ref(x, p):
        h = jnp.maximum(x @ p["pw1"] + p["pb1"], 0.0)
        h = jnp.maximum(h @ p["pw2"] + p["pb2"], 0.0)
        logits = h @ p["pw3"] + p["pb3"]
        probs = jax.nn.softmax(logits, axis=-1)
        v = jnp.maximum(x @ p["vw1"] + p["vb1"], 0.0)
        v = jnp.maximum(v @ p["vw2"] + p["vb2"], 0.0)
        v = v @ p["vw3"] + p["vb3"]
        return probs, v

    ref_probs, ref_value = ref(state, params)
    assert action_probs.shape == (B, ACTION_DIM)
    assert value.shape == (B, 1)
    assert jnp.allclose(action_probs, ref_probs, atol=1e-2, rtol=1e-2)
    assert jnp.allclose(value, ref_value, atol=1e-2, rtol=1e-2)
    # Exact reciprocal in the softmax -> probabilities sum to 1 within f32 eps.
    assert jnp.allclose(jnp.sum(action_probs, axis=-1), 1.0, atol=1e-5)

    print("KERNEL_OK")
</pallas_src>

<mosaic_0001>
module attributes {stable_mosaic.version = 11 : i64} {
  func.func @ppo_fused_kernel(%arg0: i32, %arg1: memref<8x16xf32, #tpu.memory_space<vmem>>, %arg2: memref<16x128xbf16, #tpu.memory_space<vmem>>, %arg3: memref<1x128xf32, #tpu.memory_space<vmem>>, %arg4: memref<128x128xbf16, #tpu.memory_space<vmem>>, %arg5: memref<1x128xf32, #tpu.memory_space<vmem>>, %arg6: memref<128x128xbf16, #tpu.memory_space<vmem>>, %arg7: memref<1x128xf32, #tpu.memory_space<vmem>>, %arg8: memref<8x128xf32, #tpu.memory_space<vmem>>) attributes {dimension_semantics = [#tpu.dimension_semantics<parallel>], iteration_bounds = array<i64: 1>, scalar_prefetch = 0 : i64, scratch_operands = 0 : i64, tpu.core_type = #tpu.core_type<tc>, window_params = [{transform_indices = @transform_0, window_bounds = array<i64: 8, 16>}, {pipeline_mode = #tpu.pipeline_mode<synchronous>, transform_indices = @transform_1, window_bounds = array<i64: 16, 128>}, {pipeline_mode = #tpu.pipeline_mode<synchronous>, transform_indices = @transform_2, window_bounds = array<i64: 1, 128>}, {pipeline_mode = #tpu.pipeline_mode<synchronous>, transform_indices = @transform_3, window_bounds = array<i64: 128, 128>}, {pipeline_mode = #tpu.pipeline_mode<synchronous>, transform_indices = @transform_4, window_bounds = array<i64: 1, 128>}, {pipeline_mode = #tpu.pipeline_mode<synchronous>, transform_indices = @transform_5, window_bounds = array<i64: 128, 128>}, {pipeline_mode = #tpu.pipeline_mode<synchronous>, transform_indices = @transform_6, window_bounds = array<i64: 1, 128>}, {transform_indices = @transform_7, window_bounds = array<i64: 8, 128>}]} {
    %c0 = arith.constant 0 : index
    %c0_0 = arith.constant 0 : index
    %0 = vector.load %arg1[%c0, %c0_0] : memref<8x16xf32, #tpu.memory_space<vmem>>, vector<8x16xf32>
    %1 = arith.truncf %0 : vector<8x16xf32> to vector<8x16xbf16>
    %c0_1 = arith.constant 0 : index
    %c0_2 = arith.constant 0 : index
    %2 = vector.load %arg2[%c0_1, %c0_2] : memref<16x128xbf16, #tpu.memory_space<vmem>>, vector<16x128xbf16>
    %cst = arith.constant dense<0.000000e+00> : vector<8x128xf32>
    %3 = tpu.matmul %1, %2, %cst {dimension_numbers = #tpu.dot_dimension_numbers<[1], [0], [0], [1], [0, 0, 1, 1], [], []>} : vector<8x16xbf16>, vector<16x128xbf16>, vector<8x128xf32> -> vector<8x128xf32>
    %c0_3 = arith.constant 0 : index
    %c0_4 = arith.constant 0 : index
    %4 = vector.load %arg3[%c0_3, %c0_4] : memref<1x128xf32, #tpu.memory_space<vmem>>, vector<1x128xf32>
    %5 = vector.broadcast %4 : vector<1x128xf32> to vector<8x128xf32>
    %6 = arith.addf %3, %5 : vector<8x128xf32>
    %cst_5 = arith.constant 0.000000e+00 : f32
    %7 = vector.broadcast %cst_5 : f32 to vector<8x128xf32>
    %8 = arith.maximumf %6, %7 : vector<8x128xf32>
    %9 = arith.truncf %8 : vector<8x128xf32> to vector<8x128xbf16>
    %c0_6 = arith.constant 0 : index
    %c0_7 = arith.constant 0 : index
    %10 = vector.load %arg4[%c0_6, %c0_7] : memref<128x128xbf16, #tpu.memory_space<vmem>>, vector<128x128xbf16>
    %cst_8 = arith.constant dense<0.000000e+00> : vector<8x128xf32>
    %11 = tpu.matmul %9, %10, %cst_8 {dimension_numbers = #tpu.dot_dimension_numbers<[1], [0], [0], [1], [0, 0, 1, 1], [], []>} : vector<8x128xbf16>, vector<128x128xbf16>, vector<8x128xf32> -> vector<8x128xf32>
    %c0_9 = arith.constant 0 : index
    %c0_10 = arith.constant 0 : index
    %12 = vector.load %arg5[%c0_9, %c0_10] : memref<1x128xf32, #tpu.memory_space<vmem>>, vector<1x128xf32>
    %13 = vector.broadcast %12 : vector<1x128xf32> to vector<8x128xf32>
    %14 = arith.addf %11, %13 : vector<8x128xf32>
    %cst_11 = arith.constant 0.000000e+00 : f32
    %15 = vector.broadcast %cst_11 : f32 to vector<8x128xf32>
    %16 = arith.maximumf %14, %15 : vector<8x128xf32>
    %17 = arith.truncf %16 : vector<8x128xf32> to vector<8x128xbf16>
    %c0_12 = arith.constant 0 : index
    %c0_13 = arith.constant 0 : index
    %18 = vector.load %arg6[%c0_12, %c0_13] : memref<128x128xbf16, #tpu.memory_space<vmem>>, vector<128x128xbf16>
    %cst_14 = arith.constant dense<0.000000e+00> : vector<8x128xf32>
    %19 = tpu.matmul %17, %18, %cst_14 {dimension_numbers = #tpu.dot_dimension_numbers<[1], [0], [0], [1], [0, 0, 1, 1], [], []>} : vector<8x128xbf16>, vector<128x128xbf16>, vector<8x128xf32> -> vector<8x128xf32>
    %c0_15 = arith.constant 0 : index
    %c0_16 = arith.constant 0 : index
    %20 = vector.load %arg7[%c0_15, %c0_16] : memref<1x128xf32, #tpu.memory_space<vmem>>, vector<1x128xf32>
    %21 = vector.broadcast %20 : vector<1x128xf32> to vector<8x128xf32>
    %22 = arith.addf %19, %21 : vector<8x128xf32>
    %23 = tpu.iota {dimensions = array<i32: 1>} : vector<8x128xi32>
    %c4_i32 = arith.constant 4 : i32
    %24 = vector.broadcast %c4_i32 : i32 to vector<8x128xi32>
    %25 = arith.cmpi slt, %23, %24 : vector<8x128xi32>
    %cst_17 = arith.constant 0xFF800000 : f32
    %26 = vector.broadcast %cst_17 : f32 to vector<8x128xf32>
    %27 = arith.select %25, %22, %26 : vector<8x128xi1>, vector<8x128xf32>
    %cst_18 = arith.constant dense<0xFF800000> : vector<8xf32>
    %28 = vector.multi_reduction <maximumf>, %27, %cst_18 [1] : vector<8x128xf32> to vector<8xf32>
    %29 = vector.shape_cast %28 : vector<8xf32> to vector<8x1xf32>
    %30 = vector.broadcast %29 : vector<8x1xf32> to vector<8x128xf32>
    %31 = arith.subf %27, %30 : vector<8x128xf32>
    %32 = math.exp %31 : vector<8x128xf32>
    %cst_19 = arith.constant dense<0.000000e+00> : vector<8xf32>
    %33 = vector.multi_reduction <add>, %32, %cst_19 [1] : vector<8x128xf32> to vector<8xf32>
    %34 = vector.shape_cast %33 : vector<8xf32> to vector<8x1xf32>
    %35 = vector.broadcast %34 : vector<8x1xf32> to vector<8x128xf32>
    %36 = arith.divf %32, %35 : vector<8x128xf32>
    %c4_i32_20 = arith.constant 4 : i32
    %37 = vector.broadcast %c4_i32_20 : i32 to vector<8x128xi32>
    %38 = arith.cmpi eq, %23, %37 : vector<8x128xi32>
    %cst_21 = arith.constant 0.000000e+00 : f32
    %39 = vector.broadcast %cst_21 : f32 to vector<8x128xf32>
    %40 = arith.select %38, %22, %39 : vector<8x128xi1>, vector<8x128xf32>
    %41 = arith.select %25, %36, %40 : vector<8x128xi1>, vector<8x128xf32>
    %c0_22 = arith.constant 0 : index
    %c0_23 = arith.constant 0 : index
    %42 = vector.load %arg8[%c0_22, %c0_23] : memref<8x128xf32, #tpu.memory_space<vmem>>, vector<8x128xf32>
    tpu.vector_store %arg8[%c0_22, %c0_23], %41 {strides = array<i32>} : memref<8x128xf32, #tpu.memory_space<vmem>>, vector<8x128xf32>,
    return
  }
  func.func @transform_0(%arg0: i32) -> (i32, i32) {
    %c0_i32 = arith.constant 0 : i32
    %c0_i32_0 = arith.constant 0 : i32
    return %arg0, %c0_i32 : i32, i32
  }
  func.func @transform_1(%arg0: i32) -> (i32, i32) {
    %c0_i32 = arith.constant 0 : i32
    %c0_i32_0 = arith.constant 0 : i32
    %c0_i32_1 = arith.constant 0 : i32
    return %c0_i32, %c0_i32_0 : i32, i32
  }
  func.func @transform_2(%arg0: i32) -> (i32, i32) {
    %c0_i32 = arith.constant 0 : i32
    %c0_i32_0 = arith.constant 0 : i32
    %c0_i32_1 = arith.constant 0 : i32
    return %c0_i32, %c0_i32_0 : i32, i32
  }
  func.func @transform_3(%arg0: i32) -> (i32, i32) {
    %c0_i32 = arith.constant 0 : i32
    %c0_i32_0 = arith.constant 0 : i32
    %c0_i32_1 = arith.constant 0 : i32
    return %c0_i32, %c0_i32_0 : i32, i32
  }
  func.func @transform_4(%arg0: i32) -> (i32, i32) {
    %c0_i32 = arith.constant 0 : i32
    %c0_i32_0 = arith.constant 0 : i32
    %c0_i32_1 = arith.constant 0 : i32
    return %c0_i32, %c0_i32_0 : i32, i32
  }
  func.func @transform_5(%arg0: i32) -> (i32, i32) {
    %c0_i32 = arith.constant 0 : i32
    %c0_i32_0 = arith.constant 0 : i32
    %c0_i32_1 = arith.constant 0 : i32
    return %c0_i32, %c0_i32_0 : i32, i32
  }
  func.func @transform_6(%arg0: i32) -> (i32, i32) {
    %c0_i32 = arith.constant 0 : i32
    %c0_i32_0 = arith.constant 0 : i32
    %c0_i32_1 = arith.constant 0 : i32
    return %c0_i32, %c0_i32_0 : i32, i32
  }
  func.func @transform_7(%arg0: i32) -> (i32, i32) {
    %c0_i32 = arith.constant 0 : i32
    %c0_i32_0 = arith.constant 0 : i32
    return %arg0, %c0_i32 : i32, i32
  }
}

</mosaic_0001>

<llo_original>
// kernel: tpu_custom_call.1
$region0: #{tpu_custom_call.1}
  #allocation0 [shape = 'u32[]', space=smem, size = 0x4, offset = 0x4, fixed_abs, tag = 'smem constant byte address 0x4 - core index']
  #allocation1 [shape = 'u32[72,128]{1,0:T(1,128)}', space=vmem, size = 0x9000, scoped, tag = 'internal scratch']
  %s0 = inlined_call_operand.hbm [shape: f32[8,16], index: 0, kind: input, shape index: {}]
  %s1 = inlined_call_operand.hbm [shape: bf16[16,128], index: 1, kind: input, shape index: {}]
  %s2 = inlined_call_operand.vmem [shape: f32[1,128], index: 2, kind: input, shape index: {}]
  %s3 = inlined_call_operand.hbm [shape: bf16[128,128], index: 3, kind: input, shape index: {}]
  %s4 = inlined_call_operand.vmem [shape: f32[1,128], index: 4, kind: input, shape index: {}]
  %s5 = inlined_call_operand.hbm [shape: bf16[128,128], index: 5, kind: input, shape index: {}]
  %s6 = inlined_call_operand.vmem [shape: f32[1,128], index: 6, kind: input, shape index: {}]
  %s7 = inlined_call_operand.hbm [shape: f32[8,128], index: 7, kind: output, shape index: {}]
  %s8 = sld [smem:[#allocation0]]
  $region54: #{tpu_custom_call.1} parent=0
    _
  %s10 = ssub.s32 1, %s8
  %s11 = scalar_select 0, %s10, %s8
  $region1: #{tpu_custom_call.1} parent=0
    #allocation2 [shape = 'u8[4096]{0}', space=vmem, size = 0x1000, scoped, tag = 'input window, operand 0, single buffered']
    #allocation3 [shape = 's32[1]{0}', space=sflag, size = 0x4, scoped, tag = 'scoped memory for tpu_custom_call.1']
    #allocation4 [shape = 's32[1]{0}', space=sflag, size = 0x4, scoped, tag = 'scoped memory for tpu_custom_call.1']
    #allocation5 [shape = 'u8[4096]{0}', space=vmem, size = 0x1000, scoped, tag = 'input window, operand 1, single buffered']
    #allocation6 [shape = 's32[1]{0}', space=sflag, size = 0x4, scoped, tag = 'scoped memory for tpu_custom_call.1']
    #allocation7 [shape = 'u8[32768]{0}', space=vmem, size = 0x8000, scoped, tag = 'input window, operand 3, single buffered']
    #allocation8 [shape = 'u8[32768]{0}', space=vmem, size = 0x8000, scoped, tag = 'input window, operand 5, single buffered']
    #allocation9 [shape = 's32[1]{0}', space=sflag, size = 0x4, scoped, tag = 'scoped memory for tpu_custom_call.1']
    #allocation10 [shape = 'u8[4096]{0}', space=vmem, size = 0x1000, scoped, tag = 'output window, operand 0, single buffered']
    %12 = vsyncpa [#allocation3], 0
    %13 = vsyncpa [#allocation6], 0
    %14 = vsyncpa [#allocation9], 0
    %15 = vsyncpa [#allocation4], 0
    // Predicated region
    $region2: #{tpu_custom_call.1} parent=1 // pred_check
      _
    $region3: #{tpu_custom_call.1} parent=1 // pred_check_branch
      %17 = sbr.rel (0) target = $region5
    $region4: #{tpu_custom_call.1} parent=1 // pred_region
      %19 = vsyncadd [#allocation3], 0
      %s21 = sshll.u32 %s0, 4
      %s22 = int_to_ptr.hbm [resolvable:$true] %s21
      %s23 = sshll.u32 [#allocation2], 4
      %s24 = int_to_ptr.vmem [resolvable:$true] %s23
      %26 = dma.hbm_to_vmem [thread:$0]  %s22, 128, %s24, [#allocation3]
    $region5: #{tpu_custom_call.1} parent=1 // pred_fallthru
      _
    // Predicated region
    $region6: #{tpu_custom_call.1} parent=1 // pred_check
      _
    $region7: #{tpu_custom_call.1} parent=1 // pred_check_branch
      %28 = sbr.rel (0) target = $region9
    $region8: #{tpu_custom_call.1} parent=1 // pred_region
      %30 = vsyncadd [#allocation6], 0
      %s31 = sshll.u32 %s1, 4
      %s32 = int_to_ptr.hbm [resolvable:$true] %s31
      %s33 = sshll.u32 [#allocation5], 4
      %s34 = int_to_ptr.vmem [resolvable:$true] %s33
      %39 = dma.hbm_to_vmem [thread:$0]  %s32, 128, %s34, [#allocation6], 64, 64, 4
    $region9: #{tpu_custom_call.1} parent=1 // pred_fallthru
      _
    // Predicated region
    $region10: #{tpu_custom_call.1} parent=1 // pred_check
      _
    $region11: #{tpu_custom_call.1} parent=1 // pred_check_branch
      %41 = sbr.rel (0) target = $region13
    $region12: #{tpu_custom_call.1} parent=1 // pred_region
      _
    $region13: #{tpu_custom_call.1} parent=1 // pred_fallthru
      _
    // Predicated region
    $region14: #{tpu_custom_call.1} parent=1 // pred_check
      _
    $region15: #{tpu_custom_call.1} parent=1 // pred_check_branch
      %43 = sbr.rel (0) target = $region17
    $region16: #{tpu_custom_call.1} parent=1 // pred_region
      %45 = vsyncadd [#allocation6], 0
      %s46 = sshll.u32 %s3, 4
      %s47 = int_to_ptr.hbm [resolvable:$true] %s46
      %s48 = sshll.u32 [#allocation7], 4
      %s49 = int_to_ptr.vmem [resolvable:$true] %s48
      %54 = dma.hbm_to_vmem [thread:$0]  %s47, 1024, %s49, [#allocation6], 64, 64, 4
    $region17: #{tpu_custom_call.1} parent=1 // pred_fallthru
      _
    // Predicated region
    $region18: #{tpu_custom_call.1} parent=1 // pred_check
      _
    $region19: #{tpu_custom_call.1} parent=1 // pred_check_branch
      %56 = sbr.rel (0) target = $region21
    $region20: #{tpu_custom_call.1} parent=1 // pred_region
      _
    $region21: #{tpu_custom_call.1} parent=1 // pred_fallthru
      _
    // Predicated region
    $region22: #{tpu_custom_call.1} parent=1 // pred_check
      _
    $region23: #{tpu_custom_call.1} parent=1 // pred_check_branch
      %58 = sbr.rel (0) target = $region25
    $region24: #{tpu_custom_call.1} parent=1 // pred_region
      %60 = vsyncadd [#allocation9], 0
      %s61 = sshll.u32 %s5, 4
      %s62 = int_to_ptr.hbm [resolvable:$true] %s61
      %s63 = sshll.u32 [#allocation8], 4
      %s64 = int_to_ptr.vmem [resolvable:$true] %s63
      %69 = dma.hbm_to_vmem [thread:$0]  %s62, 1024, %s64, [#allocation9], 64, 64, 4
    $region25: #{tpu_custom_call.1} parent=1 // pred_fallthru
      _
    // Predicated region
    $region26: #{tpu_custom_call.1} parent=1 // pred_check
      _
    $region27: #{tpu_custom_call.1} parent=1 // pred_check_branch
      %71 = sbr.rel (0) target = $region29
    $region28: #{tpu_custom_call.1} parent=1 // pred_region
      _
    $region29: #{tpu_custom_call.1} parent=1 // pred_fallthru
      _
    // Predicated region
    $region30: #{tpu_custom_call.1} parent=1 // pred_check
      _
    $region31: #{tpu_custom_call.1} parent=1 // pred_check_branch
      %73 = sbr.rel (0) target = $region33
    $region32: #{tpu_custom_call.1} parent=1 // pred_region
      %75 = dma.done [#allocation3], 128
    $region33: #{tpu_custom_call.1} parent=1 // pred_fallthru
      _
    // Predicated region
    $region34: #{tpu_custom_call.1} parent=1 // pred_check
      _
    $region35: #{tpu_custom_call.1} parent=1 // pred_check_branch
      %77 = sbr.rel (0) target = $region37
    $region36: #{tpu_custom_call.1} parent=1 // pred_region
      %79 = dma.done [#allocation6], 128
    $region37: #{tpu_custom_call.1} parent=1 // pred_fallthru
      _
    // Predicated region
    $region38: #{tpu_custom_call.1} parent=1 // pred_check
      _
    $region39: #{tpu_custom_call.1} parent=1 // pred_check_branch
      %81 = sbr.rel (0) target = $region41
    $region40: #{tpu_custom_call.1} parent=1 // pred_region
      %83 = dma.done [#allocation6], 1024
    $region41: #{tpu_custom_call.1} parent=1 // pred_fallthru
      _
    // Predicated region
    $region42: #{tpu_custom_call.1} parent=1 // pred_check
      _
    $region43: #{tpu_custom_call.1} parent=1 // pred_check_branch
      %85 = sbr.rel (0) target = $region45
    $region44: #{tpu_custom_call.1} parent=1 // pred_region
      %87 = dma.done [#allocation9], 1024
    $region45: #{tpu_custom_call.1} parent=1 // pred_fallthru
      _
    %v89 = vld [vmem:[#allocation2] sm:$0xff]
    %v90 = vpack.c.bf16 %v89, %v89
    %v91 = vld [vmem:[#allocation5] sm:$0xf]
    %v92 = vld [vmem:[#allocation5 + $0x4] sm:$0xf]
    %v93 = vld [vmem:[%s2] sm:$0x1]
    %v95 = vperm.slane %v93, 0
    %v99 = vunpack.c.l.b16 %v91
    %v100 = vunpack.c.l.b16 %v92
    %v101 = vpack.c.b16 %v100, %v99
    %vm103 = vcmask 130048
    %v105 = vsel %vm103, %v90, 0
    %107 = vmatpush.bf16.msra.mxu0 0
    %108 = vmatpush.bf16.msra.mxu0 0
    %109 = vmatpush.bf16.msra.mxu0 0
    %110 = vmatpush.bf16.msra.mxu0 0
    %111 = vmatpush.bf16.msra.mxu0 0
    %112 = vmatpush.bf16.msra.mxu0 0
    %113 = vmatpush.bf16.msra.mxu0 0
    %114 = vmatpush.bf16.msra.mxu0 %v101
    %115 = vmatmul.bf16.gmra.mxu0 %v105
    %v116 = vpop.f32.mrf.mxu0
    %v117 = vadd.f32 %v95, %v116
    %v118 = vpop.f32.mrf.mxu0
    %119 = vdwg.mxu0
    %v120 = vmax.f32 %v117, 0.0
    %v121 = vpack.c.bf16 %v120, %v120
    %v122 = vld [vmem:[#allocation7] sm:$0xf]
    %v123 = vld [vmem:[#allocation7 + $0x4] sm:$0xf]
    %v124 = vld [vmem:[#allocation7 + $0x8] sm:$0xf]
    %v125 = vld [vmem:[#allocation7 + $0xc] sm:$0xf]
    %v126 = vld [vmem:[#allocation7 + $0x10] sm:$0xf]
    %v127 = vld [vmem:[#allocation7 + $0x14] sm:$0xf]
    %v128 = vld [vmem:[#allocation7 + $0x18] sm:$0xf]
    %v129 = vld [vmem:[#allocation7 + $0x1c] sm:$0xf]
    %v130 = vld [vmem:[#allocation7 + $0x20] sm:$0xf]
    %v131 = vld [vmem:[#allocation7 + $0x24] sm:$0xf]
    %v132 = vld [vmem:[#allocation7 + $0x28] sm:$0xf]
    %v133 = vld [vmem:[#allocation7 + $0x2c] sm:$0xf]
    %v134 = vld [vmem:[#allocation7 + $0x30] sm:$0xf]
    %v135 = vld [vmem:[#allocation7 + $0x34] sm:$0xf]
    %v136 = vld [vmem:[#allocation7 + $0x38] sm:$0xf]
    %v137 = vld [vmem:[#allocation7 + $0x3c] sm:$0xf]
    %v138 = vld [vmem:[%s4] sm:$0x1]
    %v140 = vperm.slane %v138, 0
    %v158 = vunpack.c.l.b16 %v122
    %v159 = vunpack.c.l.b16 %v123
    %v160 = vunpack.c.l.b16 %v124
    %v161 = vunpack.c.l.b16 %v125
    %v162 = vunpack.c.l.b16 %v126
    %v163 = vunpack.c.l.b16 %v127
    %v164 = vunpack.c.l.b16 %v128
    %v165 = vunpack.c.l.b16 %v129
    %v166 = vunpack.c.l.b16 %v130
    %v167 = vunpack.c.l.b16 %v131
    %v168 = vunpack.c.l.b16 %v132
    %v169 = vunpack.c.l.b16 %v133
    %v170 = vunpack.c.l.b16 %v134
    %v171 = vunpack.c.l.b16 %v135
    %v172 = vunpack.c.l.b16 %v136
    %v173 = vunpack.c.l.b16 %v137
    %v174 = vpack.c.b16 %v159, %v158
    %v175 = vpack.c.b16 %v161, %v160
    %v176 = vpack.c.b16 %v163, %v162
    %v177 = vpack.c.b16 %v165, %v164
    %v178 = vpack.c.b16 %v167, %v166
    %v179 = vpack.c.b16 %v169, %v168
    %v180 = vpack.c.b16 %v171, %v170
    %v181 = vpack.c.b16 %v173, %v172
    %190 = vmatpush.bf16.msra.mxu0 %v181
    %191 = vmatpush.bf16.msra.mxu0 %v180
    %192 = vmatpush.bf16.msra.mxu0 %v179
    %193 = vmatpush.bf16.msra.mxu0 %v178
    %194 = vmatpush.bf16.msra.mxu0 %v177
    %195 = vmatpush.bf16.msra.mxu0 %v176
    %196 = vmatpush.bf16.msra.mxu0 %v175
    %197 = vmatpush.bf16.msra.mxu0 %v174
    %198 = vmatmul.bf16.gmra.mxu0 %v121
    %v199 = vpop.f32.mrf.mxu0
    %v200 = vadd.f32 %v140, %v199
    %v201 = vpop.f32.mrf.mxu0
    %202 = vdwg.mxu0
    %v203 = vmax.f32 %v200, 0.0
    %v204 = vpack.c.bf16 %v203, %v203
    %v205 = vld [vmem:[#allocation8] sm:$0xf]
    %v206 = vld [vmem:[#allocation8 + $0x4] sm:$0xf]
    %v207 = vld [vmem:[#allocation8 + $0x8] sm:$0xf]
    %v208 = vld [vmem:[#allocation8 + $0xc] sm:$0xf]
    %v209 = vld [vmem:[#allocation8 + $0x10] sm:$0xf]
    %v210 = vld [vmem:[#allocation8 + $0x14] sm:$0xf]
    %v211 = vld [vmem:[#allocation8 + $0x18] sm:$0xf]
    %v212 = vld [vmem:[#allocation8 + $0x1c] sm:$0xf]
    %v213 = vld [vmem:[#allocation8 + $0x20] sm:$0xf]
    %v214 = vld [vmem:[#allocation8 + $0x24] sm:$0xf]
    %v215 = vld [vmem:[#allocation8 + $0x28] sm:$0xf]
    %v216 = vld [vmem:[#allocation8 + $0x2c] sm:$0xf]
    %v217 = vld [vmem:[#allocation8 + $0x30] sm:$0xf]
    %v218 = vld [vmem:[#allocation8 + $0x34] sm:$0xf]
    %v219 = vld [vmem:[#allocation8 + $0x38] sm:$0xf]
    %v220 = vld [vmem:[#allocation8 + $0x3c] sm:$0xf]
    %v221 = vld [vmem:[%s6] sm:$0x1]
    %v223 = vperm.slane %v221, 0
    %v241 = vunpack.c.l.b16 %v205
    %v242 = vunpack.c.l.b16 %v206
    %v243 = vunpack.c.l.b16 %v207
    %v244 = vunpack.c.l.b16 %v208
    %v245 = vunpack.c.l.b16 %v209
    %v246 = vunpack.c.l.b16 %v210
    %v247 = vunpack.c.l.b16 %v211
    %v248 = vunpack.c.l.b16 %v212
    %v249 = vunpack.c.l.b16 %v213
    %v250 = vunpack.c.l.b16 %v214
    %v251 = vunpack.c.l.b16 %v215
    %v252 = vunpack.c.l.b16 %v216
    %v253 = vunpack.c.l.b16 %v217
    %v254 = vunpack.c.l.b16 %v218
    %v255 = vunpack.c.l.b16 %v219
    %v256 = vunpack.c.l.b16 %v220
    %v257 = vpack.c.b16 %v242, %v241
    %v258 = vpack.c.b16 %v244, %v243
    %v259 = vpack.c.b16 %v246, %v245
    %v260 = vpack.c.b16 %v248, %v247
    %v261 = vpack.c.b16 %v250, %v249
    %v262 = vpack.c.b16 %v252, %v251
    %v263 = vpack.c.b16 %v254, %v253
    %v264 = vpack.c.b16 %v256, %v255
    %273 = vmatpush.bf16.msra.mxu0 %v264
    %274 = vmatpush.bf16.msra.mxu0 %v263
    %275 = vmatpush.bf16.msra.mxu0 %v262
    %276 = vmatpush.bf16.msra.mxu0 %v261
    %277 = vmatpush.bf16.msra.mxu0 %v260
    %278 = vmatpush.bf16.msra.mxu0 %v259
    %279 = vmatpush.bf16.msra.mxu0 %v258
    %280 = vmatpush.bf16.msra.mxu0 %v257
    %281 = vmatmul.bf16.gmra.mxu0 %v204
    %v282 = vpop.f32.mrf.mxu0
    %v283 = vadd.f32 %v223, %v282
    %v284 = vpop.f32.mrf.mxu0
    %285 = vdwg.mxu0
    %v286 = vlaneseq
    %v287 = vand.u32 %v286, 127
    %vm288 = vcmp.lt.s32.totalorder %v287, 4
    %v289 = vsel %vm288, %v283, -inf
    %290 = vmax.xlane.f32.xlu0 %v289
    %v291 = vpop.xlane.xlu0 %290
    %v292 = vsub.f32 %v289, %v291
    %v293 = vmul.f32 %v292, 1.442695
    %v294 = vpow.pop %v293
    %295 = vadd.xlane.f32.xlu0 %v294
    %v296 = vpop.xlane.xlu0 %295
    %v297 = vrcp.pop %v296
    %v298 = vmul.f32 %v296, %v297
    %v299 = vsub.f32 1.0, %v298
    %v300 = vmul.f32 %v297, %v299
    %v301 = vadd.f32 %v297, %v300
    %vm302 = vweird.f32 %v296
    %vm303 = vweird.f32 %v297
    %vm304 = vmor %vm302, %vm303
    %v305 = vsel %vm304, %v297, %v301
    %v306 = vand.u32 2147483647, %v296
    %vm307 = vcmp.eq.f32.partialorder %v306, 8.507059e+37
    %v308 = vand.u32 %v296, 2147483648
    %v309 = vor.u32 1.1754944e-38, %v308
    %v310 = vsel %vm307, %v309, %v305
    %v311 = vmul.f32 %v294, %v310
    %vm312 = vcmp.eq.s32.totalorder %v287, 4
    %v313 = vsel %vm312, %v283, 0.0
    %v314 = vsel %vm288, %v311, %v313
    %315 = vst [vmem:[#allocation10] sm:$0xff] %v314
    // Predicated region
    $region46: #{tpu_custom_call.1} parent=1 // pred_check
      _
    $region47: #{tpu_custom_call.1} parent=1 // pred_check_branch
      %317 = sbr.rel (0) target = $region49
    $region48: #{tpu_custom_call.1} parent=1 // pred_region
      %319 = vsyncadd [#allocation4], 0
      %s321 = sshll.u32 [#allocation10], 4
      %s322 = int_to_ptr.vmem [resolvable:$true] %s321
      %s323 = sshll.u32 %s7, 4
      %s324 = int_to_ptr.hbm [resolvable:$true] %s323
      %326 = dma.vmem_to_hbm [thread:$0]  %s322, 128, %s324, [#allocation4]
    $region49: #{tpu_custom_call.1} parent=1 // pred_fallthru
      _
    // Predicated region
    $region50: #{tpu_custom_call.1} parent=1 // pred_check
      _
    $region51: #{tpu_custom_call.1} parent=1 // pred_check_branch
      %328 = sbr.rel (0) target = $region53
    $region52: #{tpu_custom_call.1} parent=1 // pred_region
      %330 = dma.done [#allocation4], 128
    $region53: #{tpu_custom_call.1} parent=1 // pred_fallthru
      _
    %331 = vsyncpa [#allocation3], 1
    %332 = vsyncpa [#allocation6], 1
    %333 = vsyncpa [#allocation9], 1
    %334 = vsyncpa [#allocation4], 1

</llo_original>
